<compile_context>
chip_gen: v7x
topology: tpu7x:2x2x1
jax: 0.10.0
libtpu: 0.0.40
codegen_flags: <defaults>
</compile_context>

<pallas_src>
import jax
import jax.numpy as jnp
from jax.experimental import pallas as pl
from jax.experimental.pallas import tpu as pltpu

_LANE_W = 512  # lane-dense slab width (multiple of 128)


def _rbf_kernel(params_ref, x_ref, o_ref):
    """Elementwise RBF on a lane-dense tile. params = [a, b, -1/(c*c)] in SMEM."""
    a = params_ref[0]
    b = params_ref[1]
    neg_inv_c2 = params_ref[2]
    d = x_ref[...] - b
    o_ref[...] = a * jnp.exp(d * d * neg_inv_c2)


def _device_generation():
    """Best-effort TPU generation detection (5, 6, 7) from device_kind."""
    try:
        kind = jax.devices()[0].device_kind.lower()
    except Exception:
        return None
    if "7x" in kind or "v7" in kind:
        return 7
    if "v6" in kind:
        return 6
    if "v5" in kind:
        return 5
    return None


def _round_up8(n):
    return ((n + 7) // 8) * 8


def _select_block_rows(rows, gen):
    """rows is a multiple of 8. Returns a multiple of 8 <= rows (device-aware)."""
    if gen in (6, 7):
        max_rows = 2048   # 4 MiB block; 16 MiB resident fits 32 MiB scoped-VMEM default
    else:
        max_rows = 1024   # v5e / unknown: 8 MiB resident fits 16 MiB scoped-VMEM default
    block_rows = min(max_rows, rows)
    if gen == 7 and rows >= 16:
        # Megacore: make the grid step count even so both TensorCores get work.
        steps = pl.cdiv(rows, block_rows)
        if steps % 2 != 0:
            steps += 1
            block_rows = min(block_rows, _round_up8(pl.cdiv(rows, steps)))
    return block_rows


def my_rbf_forward(x, a, b, c, *, col_idx=0):
    """x: (N, D) float32; a, b, c: python scalars. Returns (N, 1) float32."""
    N = x.shape[0]

    # --- wrapper-side "extract" + layout plumbing (not in the kernel) ---------------
    col = x[:, col_idx].astype(jnp.float32)                    # (N,)
    params = jnp.asarray([a, b, -1.0 / (c * c)], jnp.float32)  # precomputed scale

    # Single pad: flat column -> multiple of 8*_LANE_W, then lane-dense slab.
    flat_pad = (-N) % (8 * _LANE_W)
    if flat_pad:
        col = jnp.pad(col, (0, flat_pad))
    rows = col.shape[0] // _LANE_W                              # multiple of 8
    slab = col.reshape(rows, _LANE_W)

    gen = _device_generation()
    block_rows = _select_block_rows(rows, gen)
    grid = (pl.cdiv(rows, block_rows),)  # ragged last block handled by Pallas masking

    total = rows * _LANE_W  # padded element count actually moved through HBM
    out_slab = pl.pallas_call(
        _rbf_kernel,
        out_shape=jax.ShapeDtypeStruct((rows, _LANE_W), jnp.float32),
        grid=grid,
        in_specs=[
            pl.BlockSpec(memory_space=pltpu.SMEM),                       # params [a, b, -1/c^2]
            pl.BlockSpec((block_rows, _LANE_W), lambda i: (i, 0)),       # lane-dense input tile
        ],
        out_specs=pl.BlockSpec((block_rows, _LANE_W), lambda i: (i, 0)), # lane-dense output tile
        compiler_params=pltpu.CompilerParams(
            dimension_semantics=("parallel",),
        ),
        cost_estimate=pl.CostEstimate(
            flops=4 * total,
            transcendentals=total,
            bytes_accessed=2 * 4 * total,
        ),
    )(params, slab)

    # Un-pad and restore the (N, 1) result shape of `extract(...)`.
    return out_slab.reshape(-1)[:N].reshape(N, 1)


if __name__ == "__main__":
    # Deterministic parameter init exactly as in myRBF.__init__:
    a = -0.3   # nn.Parameter([-0.3])
    b = 0.5    # buffer tensor([0.5])
    c = 0.5    # nn.Parameter([0.5])

    key = jax.random.PRNGKey(0)

    # Small synthetic "LabelTensor": N=256 collocation points, D=4 variables,
    # input_variables = [variables[0]] -> column 0.
    N, D = 256, 4
    x = jax.random.normal(key, (N, D), dtype=jnp.float32)
    out = jax.block_until_ready(my_rbf_forward(x, a, b, c, col_idx=0))

    x_col = x[:, 0:1]
    ref = a * jnp.exp(-((x_col - b) ** 2) / (c ** 2))
    assert out.shape == (N, 1) and out.dtype == jnp.float32
    assert jnp.allclose(out, ref, atol=1e-6, rtol=1e-6), "mismatch vs reference (N=256)"

    # Second check: N not a multiple of anything nice (exercises the single-pad path).
    N2 = 1000
    x2 = jax.random.normal(jax.random.PRNGKey(0), (N2, D), dtype=jnp.float32)
    out2 = jax.block_until_ready(my_rbf_forward(x2, a, b, c, col_idx=0))
    ref2 = a * jnp.exp(-((x2[:, 0:1] - b) ** 2) / (c ** 2))
    assert out2.shape == (N2, 1)
    assert jnp.allclose(out2, ref2, atol=1e-6, rtol=1e-6), "mismatch vs reference (N=1000)"

    print("KERNEL_OK")
</pallas_src>

<mosaic_0001>
module attributes {stable_mosaic.version = 11 : i64} {
  func.func @_rbf_kernel(%arg0: i32, %arg1: memref<3xf32, #tpu.memory_space<smem>>, %arg2: memref<8x512xf32, #tpu.memory_space<vmem>>, %arg3: memref<8x512xf32, #tpu.memory_space<vmem>>) attributes {dimension_semantics = [#tpu.dimension_semantics<parallel>], iteration_bounds = array<i64: 1>, scalar_prefetch = 0 : i64, scratch_operands = 0 : i64, tpu.core_type = #tpu.core_type<tc>, window_params = [{transform_indices = @transform_0, window_bounds = array<i64: 3>}, {transform_indices = @transform_1, window_bounds = array<i64: 8, 512>}, {transform_indices = @transform_2, window_bounds = array<i64: 8, 512>}]} {
    %c0 = arith.constant 0 : index
    %0 = memref.load %arg1[%c0] : memref<3xf32, #tpu.memory_space<smem>>
    %c1 = arith.constant 1 : index
    %1 = memref.load %arg1[%c1] : memref<3xf32, #tpu.memory_space<smem>>
    %c2 = arith.constant 2 : index
    %2 = memref.load %arg1[%c2] : memref<3xf32, #tpu.memory_space<smem>>
    %c0_0 = arith.constant 0 : index
    %c0_1 = arith.constant 0 : index
    %3 = vector.load %arg2[%c0_0, %c0_1] : memref<8x512xf32, #tpu.memory_space<vmem>>, vector<8x512xf32>
    %4 = vector.broadcast %1 : f32 to vector<8x512xf32>
    %5 = arith.subf %3, %4 : vector<8x512xf32>
    %6 = arith.mulf %5, %5 : vector<8x512xf32>
    %7 = vector.broadcast %2 : f32 to vector<8x512xf32>
    %8 = arith.mulf %6, %7 : vector<8x512xf32>
    %9 = math.exp %8 : vector<8x512xf32>
    %10 = vector.broadcast %0 : f32 to vector<8x512xf32>
    %11 = arith.mulf %10, %9 : vector<8x512xf32>
    %c0_2 = arith.constant 0 : index
    %c0_3 = arith.constant 0 : index
    %12 = vector.load %arg3[%c0_2, %c0_3] : memref<8x512xf32, #tpu.memory_space<vmem>>, vector<8x512xf32>
    tpu.vector_store %arg3[%c0_2, %c0_3], %11 {strides = array<i32>} : memref<8x512xf32, #tpu.memory_space<vmem>>, vector<8x512xf32>,
    return
  }
  func.func @transform_0(%arg0: i32) -> i32 {
    %c0_i32 = arith.constant 0 : i32
    %c0_i32_0 = arith.constant 0 : i32
    return %c0_i32 : i32
  }
  func.func @transform_1(%arg0: i32) -> (i32, i32) {
    %c0_i32 = arith.constant 0 : i32
    %c0_i32_0 = arith.constant 0 : i32
    return %arg0, %c0_i32 : i32, i32
  }
  func.func @transform_2(%arg0: i32) -> (i32, i32) {
    %c0_i32 = arith.constant 0 : i32
    %c0_i32_0 = arith.constant 0 : i32
    return %arg0, %c0_i32 : i32, i32
  }
}

</mosaic_0001>

<llo_original>
// kernel: tpu_custom_call.1
$region0: #{tpu_custom_call.1}
  #allocation0 [shape = 'u32[]', space=smem, size = 0x4, offset = 0x4, fixed_abs, tag = 'smem constant byte address 0x4 - core index']
  #allocation1 [shape = 'u32[144,128]{1,0:T(1,128)}', space=vmem, size = 0x12000, scoped, tag = 'internal scratch']
  %s0 = inlined_call_operand.hbm [shape: f32[3], index: 0, kind: input, shape index: {}]
  %s1 = inlined_call_operand.hbm [shape: f32[8,512], index: 1, kind: input, shape index: {}]
  %s2 = inlined_call_operand.hbm [shape: f32[8,512], index: 2, kind: output, shape index: {}]
  %s3 = sld [smem:[#allocation0]]
  $region26: #{tpu_custom_call.1} parent=0
    _
  %s5 = ssub.s32 1, %s3
  %s6 = scalar_select 0, %s5, %s3
  $region1: #{tpu_custom_call.1} parent=0
    #allocation2 [shape = 'u8[512]{0}', space=smem, size = 0x200, scoped, tag = 'input window, operand 0, single buffered']
    #allocation3 [shape = 's32[1]{0}', space=sflag, size = 0x4, scoped, tag = 'scoped memory for tpu_custom_call.1']
    #allocation4 [shape = 's32[1]{0}', space=sflag, size = 0x4, scoped, tag = 'scoped memory for tpu_custom_call.1']
    #allocation5 [shape = 's32[1]{0}', space=sflag, size = 0x4, scoped, tag = 'scoped memory for tpu_custom_call.1']
    #allocation6 [shape = 'u8[16384]{0}', space=vmem, size = 0x4000, scoped, tag = 'input window, operand 1, single buffered']
    #allocation7 [shape = 'u8[16384]{0}', space=vmem, size = 0x4000, scoped, tag = 'output window, operand 0, single buffered']
    %7 = vsyncpa [#allocation5], 0
    %8 = vsyncpa [#allocation3], 0
    %9 = vsyncpa [#allocation4], 0
    // Predicated region
    $region2: #{tpu_custom_call.1} parent=1 // pred_check
      _
    $region3: #{tpu_custom_call.1} parent=1 // pred_check_branch
      %11 = sbr.rel (0) target = $region5
    $region4: #{tpu_custom_call.1} parent=1 // pred_region
      %s13 = ssub.s32 16, 16
      %14 = vsyncadd [#allocation5], %s13
      %17 = dma.hbm_to_smem %s0, 16, [#allocation2], [#allocation5]
    $region5: #{tpu_custom_call.1} parent=1 // pred_fallthru
      _
    // Predicated region
    $region6: #{tpu_custom_call.1} parent=1 // pred_check
      _
    $region7: #{tpu_custom_call.1} parent=1 // pred_check_branch
      %19 = sbr.rel (0) target = $region9
    $region8: #{tpu_custom_call.1} parent=1 // pred_region
      %s21 = ssub.s32 512, 512
      %22 = vsyncadd [#allocation3], %s21
      %s24 = sshll.u32 [#allocation6], 4
      %s25 = int_to_ptr.vmem [resolvable:$true] %s24
      %27 = dma.hbm_to_vmem [thread:$0]  %s1, 512, %s25, [#allocation3]
    $region9: #{tpu_custom_call.1} parent=1 // pred_fallthru
      _
    // Predicated region
    $region10: #{tpu_custom_call.1} parent=1 // pred_check
      _
    $region11: #{tpu_custom_call.1} parent=1 // pred_check_branch
      %29 = sbr.rel (0) target = $region13
    $region12: #{tpu_custom_call.1} parent=1 // pred_region
      %30 = dma.done [#allocation5], 16
    $region13: #{tpu_custom_call.1} parent=1 // pred_fallthru
      _
    // Predicated region
    $region14: #{tpu_custom_call.1} parent=1 // pred_check
      _
    $region15: #{tpu_custom_call.1} parent=1 // pred_check_branch
      %32 = sbr.rel (0) target = $region17
    $region16: #{tpu_custom_call.1} parent=1 // pred_region
      %33 = dma.done [#allocation3], 512
    $region17: #{tpu_custom_call.1} parent=1 // pred_fallthru
      _
    %34 = sfence
    %s35 = sld [smem:[#allocation2]]
    %s36 = sld [smem:[#allocation2 + $0x1]]
    %s37 = sld [smem:[#allocation2 + $0x2]]
    %v38 = vld [vmem:[#allocation6] sm:$0xff]
    %v39 = vld [vmem:[#allocation6 + $0x8] sm:$0xff]
    %v40 = vld [vmem:[#allocation6 + $0x10] sm:$0xff]
    %v41 = vld [vmem:[#allocation6 + $0x18] sm:$0xff]
    %v42 = vstv %s36
    %v43 = vsub.f32 %v38, %v42
    %v44 = vsub.f32 %v39, %v42
    %v45 = vsub.f32 %v40, %v42
    %v46 = vsub.f32 %v41, %v42
    %v47 = vmul.f32 %v43, %v43
    %v48 = vmul.f32 %v44, %v44
    %v49 = vmul.f32 %v45, %v45
    %v50 = vmul.f32 %v46, %v46
    %v51 = vstv %s37
    %v52 = vmul.f32 %v47, %v51
    %v53 = vmul.f32 %v48, %v51
    %v54 = vmul.f32 %v49, %v51
    %v55 = vmul.f32 %v50, %v51
    %v56 = vmul.f32 %v52, 1.442695
    %v57 = vpow.pop %v56
    %v58 = vmul.f32 %v53, 1.442695
    %v59 = vpow.pop %v58
    %v60 = vmul.f32 %v54, 1.442695
    %v61 = vpow.pop %v60
    %v62 = vmul.f32 %v55, 1.442695
    %v63 = vpow.pop %v62
    %v64 = vstv %s35
    %v65 = vmul.f32 %v64, %v57
    %v66 = vmul.f32 %v64, %v59
    %v67 = vmul.f32 %v64, %v61
    %v68 = vmul.f32 %v64, %v63
    %69 = vst [vmem:[#allocation7] sm:$0xff] %v65
    %70 = vst [vmem:[#allocation7 + $0x8] sm:$0xff] %v66
    %71 = vst [vmem:[#allocation7 + $0x10] sm:$0xff] %v67
    %72 = vst [vmem:[#allocation7 + $0x18] sm:$0xff] %v68
    // Predicated region
    $region18: #{tpu_custom_call.1} parent=1 // pred_check
      _
    $region19: #{tpu_custom_call.1} parent=1 // pred_check_branch
      %74 = sbr.rel (0) target = $region21
    $region20: #{tpu_custom_call.1} parent=1 // pred_region
      %s76 = ssub.s32 512, 512
      %77 = vsyncadd [#allocation4], %s76
      %s79 = sshll.u32 [#allocation7], 4
      %s80 = int_to_ptr.vmem [resolvable:$true] %s79
      %82 = dma.vmem_to_hbm [thread:$0]  %s80, 512, %s2, [#allocation4]
    $region21: #{tpu_custom_call.1} parent=1 // pred_fallthru
      _
    // Predicated region
    $region22: #{tpu_custom_call.1} parent=1 // pred_check
      _
    $region23: #{tpu_custom_call.1} parent=1 // pred_check_branch
      %84 = sbr.rel (0) target = $region25
    $region24: #{tpu_custom_call.1} parent=1 // pred_region
      %85 = dma.done [#allocation4], 512
    $region25: #{tpu_custom_call.1} parent=1 // pred_fallthru
      _
    %86 = vsyncpa [#allocation3], 1
    %87 = vsyncpa [#allocation4], 1
    %88 = vsyncpa [#allocation5], 1

</llo_original>
